<compile_context>
chip_gen: v5e
topology: v5e:2x2
jax: 0.10.0
libtpu: 0.0.40
codegen_flags: <defaults>
</compile_context>

<pallas_src>
import jax
import jax.numpy as jnp
import numpy as np
from jax.experimental import pallas as pl
from jax.experimental.pallas import tpu as pltpu


def merge_kernel(x_ref, s_ref, o_ref):
    # x_ref: (bm, bt), s_ref: (bm, 1) -> o_ref: (bm, bt)
    # Per-row gain lane-broadcasts against the (bm, bt) tile (pure VPU work).
    o_ref[...] = x_ref[...] * s_ref[...]


def _pick_block(dim, target, quantum):
    """Largest multiple of `quantum` that divides `dim` and is <= target.

    Falls back to the full dimension (always legal: a block equal to the full
    array dim satisfies the (8, 128) constraint regardless of its value).
    """
    if dim <= target:
        return dim
    if dim % quantum != 0:
        return dim
    b = (target // quantum) * quantum
    while b >= quantum:
        if dim % b == 0:
            return b
        b -= quantum
    return dim


def merge_block(x, s):
    """Pallas implementation of MergeBlock.forward(x, s) == x * s[:, :, None]."""
    B, C, T = x.shape
    assert s.shape == (B, C), (x.shape, s.shape)
    M = B * C

    # Row-major views: (B*C, T) keeps T on the lane axis; (B*C, 1) gain per row.
    xf = x.reshape(M, T)
    sf = s.reshape(M, 1).astype(x.dtype)

    # Tile rows (sublane axis, quantum 8) and time (lane axis, quantum 128).
    # Targets keep each x/out block around <= 1 MiB (f32) so double-buffered
    # in+out stays a few MiB — comfortably inside scoped VMEM on v5e/v6e/v7x
    # while still large enough (~256K elems) to sit near the HBM roofline.
    bm = _pick_block(M, 256, 8)
    bt = _pick_block(T, 1024, 128)

    grid = (M // bm, T // bt)

    out = pl.pallas_call(
        merge_kernel,
        out_shape=jax.ShapeDtypeStruct((M, T), x.dtype),
        grid=grid,
        in_specs=[
            pl.BlockSpec((bm, bt), lambda i, j: (i, j)),   # activations tile
            pl.BlockSpec((bm, 1), lambda i, j: (i, 0)),    # per-row gain
        ],
        out_specs=pl.BlockSpec((bm, bt), lambda i, j: (i, j)),
        compiler_params=pltpu.CompilerParams(
            # Fully independent tiles: both axes can split across v7x's 2 TCs.
            dimension_semantics=("parallel", "parallel"),
        ),
    )(xf, sf)
    return out.reshape(B, C, T)


# ----------------------------- pure-JAX reference -----------------------------

def merge_ref(x, s):
    # rearrange(s, 'b (c t) -> b c t', t=1) == s[:, :, None]
    return x * s[:, :, None]


# ----------------------------------- main --------------------------------------

if __name__ == "__main__":
    key = jax.random.PRNGKey(0)
    kx, ks = jax.random.split(key)
    B, C, T = 2, 4, 16                      # batch=2, channels=4, spatial=16
    x = jax.random.normal(kx, (B, C, T), jnp.float32)
    s = jax.random.normal(ks, (B, C), jnp.float32)

    out = jax.block_until_ready(merge_block(x, s))
    ref = jax.block_until_ready(merge_ref(x, s))
    np.testing.assert_allclose(np.asarray(out), np.asarray(ref), rtol=1e-6, atol=1e-6)
    assert out.shape == (B, C, T)

    print("KERNEL_OK")
</pallas_src>

<mosaic_0001>
module attributes {stable_mosaic.version = 11 : i64} {
  func.func @merge_kernel(%arg0: i32, %arg1: i32, %arg2: memref<8x16xf32, #tpu.memory_space<vmem>>, %arg3: memref<8x1xf32, #tpu.memory_space<vmem>>, %arg4: memref<8x16xf32, #tpu.memory_space<vmem>>) attributes {dimension_semantics = [#tpu.dimension_semantics<parallel>, #tpu.dimension_semantics<parallel>], iteration_bounds = array<i64: 1, 1>, scalar_prefetch = 0 : i64, scratch_operands = 0 : i64, tpu.core_type = #tpu.core_type<tc>, window_params = [{transform_indices = @transform_0, window_bounds = array<i64: 8, 16>}, {transform_indices = @transform_1, window_bounds = array<i64: 8, 1>}, {transform_indices = @transform_2, window_bounds = array<i64: 8, 16>}]} {
    %c0 = arith.constant 0 : index
    %c0_0 = arith.constant 0 : index
    %0 = vector.load %arg2[%c0, %c0_0] : memref<8x16xf32, #tpu.memory_space<vmem>>, vector<8x16xf32>
    %c0_1 = arith.constant 0 : index
    %c0_2 = arith.constant 0 : index
    %1 = vector.load %arg3[%c0_1, %c0_2] : memref<8x1xf32, #tpu.memory_space<vmem>>, vector<8x1xf32>
    %2 = vector.broadcast %1 : vector<8x1xf32> to vector<8x16xf32>
    %3 = arith.mulf %0, %2 : vector<8x16xf32>
    %c0_3 = arith.constant 0 : index
    %c0_4 = arith.constant 0 : index
    %4 = vector.load %arg4[%c0_3, %c0_4] : memref<8x16xf32, #tpu.memory_space<vmem>>, vector<8x16xf32>
    tpu.vector_store %arg4[%c0_3, %c0_4], %3 {strides = array<i32>} : memref<8x16xf32, #tpu.memory_space<vmem>>, vector<8x16xf32>,
    return
  }
  func.func @transform_0(%arg0: i32, %arg1: i32) -> (i32, i32) {
    %c0_i32 = arith.constant 0 : i32
    return %arg0, %arg1 : i32, i32
  }
  func.func @transform_1(%arg0: i32, %arg1: i32) -> (i32, i32) {
    %c0_i32 = arith.constant 0 : i32
    %c0_i32_0 = arith.constant 0 : i32
    return %arg0, %c0_i32 : i32, i32
  }
  func.func @transform_2(%arg0: i32, %arg1: i32) -> (i32, i32) {
    %c0_i32 = arith.constant 0 : i32
    return %arg0, %arg1 : i32, i32
  }
}

</mosaic_0001>

<llo_original>
// kernel: tpu_custom_call.1
$region0: #{tpu_custom_call.1}
  #allocation0 [shape = 'u32[]', space=smem, size = 0x4, offset = 0x4, fixed_abs, tag = 'smem constant byte address 0x4 - core index']
  #allocation1 [shape = 'u32[72,128]{1,0:T(1,128)}', space=vmem, size = 0x9000, scoped, tag = 'internal scratch']
  %s0 = inlined_call_operand.vmem [shape: f32[8,16], index: 0, kind: input, shape index: {}]
  %s1 = inlined_call_operand.vmem [shape: f32[8,1], index: 1, kind: input, shape index: {}]
  %s2 = inlined_call_operand.hbm [shape: f32[8,16], index: 2, kind: output, shape index: {}]
  %s3 = sld [smem:[#allocation0]]
  $region18: #{tpu_custom_call.1} parent=0
    _
  %s5 = ssub.s32 1, %s3
  %s6 = scalar_select 0, %s5, %s3
  $region1: #{tpu_custom_call.1} parent=0
    #allocation2 [shape = 'u8[4096]{0}', space=vmem, size = 0x1000, scoped, tag = 'output window, operand 0, single buffered']
    #allocation3 [shape = 's32[1]{0}', space=sflag, size = 0x4, scoped, tag = 'scoped memory for tpu_custom_call.1']
    %7 = vsyncpa [#allocation3], 0
    // Predicated region
    $region2: #{tpu_custom_call.1} parent=1 // pred_check
      _
    $region3: #{tpu_custom_call.1} parent=1 // pred_check_branch
      %9 = sbr.rel (0) target = $region5
    $region4: #{tpu_custom_call.1} parent=1 // pred_region
      _
    $region5: #{tpu_custom_call.1} parent=1 // pred_fallthru
      _
    // Predicated region
    $region6: #{tpu_custom_call.1} parent=1 // pred_check
      _
    $region7: #{tpu_custom_call.1} parent=1 // pred_check_branch
      %11 = sbr.rel (0) target = $region9
    $region8: #{tpu_custom_call.1} parent=1 // pred_region
      _
    $region9: #{tpu_custom_call.1} parent=1 // pred_fallthru
      _
    %v12 = vld [vmem:[%s0] sm:$0xff]
    %v13 = vld [vmem:[%s1] sm:$0xff]
    %15 = vset.pattern.permute.xlu0 0
    %16 = vperm.xlu0 %15, %v13
    %v17 = vpop.permute.xlu0 %16
    %v19 = vmul.f32 %v12, %v17
    %vm20 = vcmask 130048
    %21 = vst.msk [vmem:[#allocation2] sm:$0xff] %vm20, %v19
    // Predicated region
    $region10: #{tpu_custom_call.1} parent=1 // pred_check
      _
    $region11: #{tpu_custom_call.1} parent=1 // pred_check_branch
      %23 = sbr.rel (0) target = $region13
    $region12: #{tpu_custom_call.1} parent=1 // pred_region
      %25 = vsyncadd [#allocation3], 0
      %s27 = sshll.u32 [#allocation2], 4
      %s28 = int_to_ptr.vmem [resolvable:$true] %s27
      %s29 = sshll.u32 %s2, 4
      %s30 = int_to_ptr.hbm [resolvable:$true] %s29
      %32 = dma.vmem_to_hbm [thread:$0]  %s28, 128, %s30, [#allocation3]
    $region13: #{tpu_custom_call.1} parent=1 // pred_fallthru
      _
    // Predicated region
    $region14: #{tpu_custom_call.1} parent=1 // pred_check
      _
    $region15: #{tpu_custom_call.1} parent=1 // pred_check_branch
      %34 = sbr.rel (0) target = $region17
    $region16: #{tpu_custom_call.1} parent=1 // pred_region
      %36 = dma.done [#allocation3], 128
    $region17: #{tpu_custom_call.1} parent=1 // pred_fallthru
      _
    %37 = vsyncpa [#allocation3], 1

</llo_original>
